<compile_context>
chip_gen: v7x
topology: tpu7x:2x2x1
jax: 0.10.0
libtpu: 0.0.40
codegen_flags: <defaults>
</compile_context>

<pallas_src>
import jax
import jax.numpy as jnp
from jax import lax
from jax.experimental import pallas as pl
from jax.experimental.pallas import tpu as pltpu


def _make_main_kernel(valid_p, tile_p):
    """Fused projections + gating + psi + per-batch BN partial sums."""
    needs_mask = (valid_p % tile_p) != 0

    def kernel(m1_ref, m2_ref, we1_ref, be1_ref, we2_ref, be2_ref,
               wpsi_ref, bpsi_ref, w11_ref, b11_ref,
               psi_ref, sum_ref, sumsq_ref):
        # m1_ref/m2_ref: (C_ip, TP) one image's pixel tile (compute dtype)
        # weights: compute dtype; biases: f32 column vectors
        # psi_ref: (1, TP) f32; sum_ref/sumsq_ref: (C_ip, 1) f32 per-batch
        p = pl.program_id(1)

        @pl.when(p == 0)
        def _():
            sum_ref[...] = jnp.zeros_like(sum_ref)
            sumsq_ref[...] = jnp.zeros_like(sumsq_ref)

        m1 = m1_ref[...]                                   # (C_ip, TP)
        m2 = m2_ref[...]

        # 1x1 convs as (Cout, Cin) @ (Cin, TP); f32 accumulation on the MXU.
        x1 = jnp.dot(we1_ref[...], m1,
                     preferred_element_type=jnp.float32) + be1_ref[...]
        x2 = jnp.dot(we2_ref[...], m2,
                     preferred_element_type=jnp.float32) + be2_ref[...]
        a = jnp.maximum(x1 + x2, 0.0)                      # f32 (C_int, TP)

        t = jnp.dot(wpsi_ref[...], a.astype(wpsi_ref.dtype),
                    preferred_element_type=jnp.float32) + bpsi_ref[...]
        # psi is a single (1, TP) slab; exp is on the EUP, the divide is
        # immaterial next to the image-slab HBM traffic.
        psi = 1.0 / (1.0 + jnp.exp(-t))                    # f32 (1, TP)

        gated = psi * m1.astype(jnp.float32)               # f32 (C_ip, TP)
        z = jnp.dot(w11_ref[...], gated.astype(w11_ref.dtype),
                    preferred_element_type=jnp.float32) + b11_ref[...]

        psi_ref[...] = psi.astype(psi_ref.dtype)

        if needs_mask:
            # Exclude padded pixels (their z would equal the bias, not zero).
            col = lax.broadcasted_iota(jnp.int32, (1, tile_p), 1) + p * tile_p
            z = jnp.where(col < valid_p, z, 0.0)

        # Single-pass per-batch BN partials in f32.
        sum_ref[...] += jnp.sum(z, axis=1, keepdims=True)
        sumsq_ref[...] += jnp.sum(z * z, axis=1, keepdims=True)

    return kernel


def _norm_kernel(m1_ref, psi_ref, w11f_ref, shift_ref, out_ref):
    # Recompute z from (psi, map1) with BN folded into the conv weights:
    #   result = (scale*W_1x1) @ (psi*map1) + shift
    g = psi_ref[...] * m1_ref[...].astype(jnp.float32)       # f32 (C_ip, TP)
    out = jnp.dot(w11f_ref[...], g,
                  preferred_element_type=jnp.float32) + shift_ref[...]
    out_ref[...] = out.astype(out_ref.dtype)


def asm_forward(map1, map2, we1, be1, we2, be2, wpsi, bpsi, w11, b11,
                gamma, beta, eps=1e-5):
    """ASM forward. map1/map2: (N, F_ip, H, W) NCHW.

    The image tiles, dot operands and the result are kept in map1.dtype
    (pass bf16 maps for the bandwidth-optimal path); psi, biases and BN
    statistics stay in f32.  Returns (result[map1.dtype], psi[f32]) in NCHW.
    """
    N, C_ip, H, W = map1.shape
    C_int = we1.shape[0]
    P = H * W
    cdt = map1.dtype                      # tile / MXU dtype
    out_dt = map1.dtype                   # result dtype
    in_bytes = jnp.dtype(cdt).itemsize
    out_bytes = jnp.dtype(out_dt).itemsize
    f32 = jnp.float32

    # --- pixel-tile selection (pad to 128, biggest tile under VMEM budget) ---
    def rup(a, b):
        return ((a + b - 1) // b) * b

    P128 = rup(P, 128)

    def vmem_est(tp):
        # double-buffered tensor tiles + weight blocks, per pallas_call
        main = 2 * 2 * C_ip * tp * in_bytes                 # m1, m2 tiles
        main += 2 * (tp * 4 + 2 * C_ip * 4)                 # psi + stats out
        main += 2 * 4 * (2 * C_int * C_ip + 2 * C_int + C_int + 1
                         + C_ip * C_ip + C_ip)              # weights/biases
        norm = 2 * (C_ip * tp * in_bytes + tp * 4 + C_ip * tp * out_bytes
                    + 4 * (C_ip * C_ip + C_ip))
        return max(main, norm)

    budget = 28 * 1024 * 1024            # working-set target (fits v7x 64MiB)
    cap = 128
    for cand in (8192, 4096, 2048, 1024, 512, 256, 128):
        if vmem_est(cand) <= budget:
            cap = cand
            break
    TP = min(P128, cap)
    P_pad = rup(P128, TP)
    n_ptiles = P_pad // TP
    vmem_limit = int(min(56 * 1024 * 1024,
                         max(2 * vmem_est(TP), 16 * 1024 * 1024)))

    # Free, contiguous reshapes: NCHW -> (N, C, H*W).  No HBM transposes.
    m1 = map1.reshape(N, C_ip, P)
    m2 = map2.reshape(N, C_ip, P)
    if P_pad != P:
        pad = ((0, 0), (0, 0), (0, P_pad - P))
        m1 = jnp.pad(m1, pad)
        m2 = jnp.pad(m2, pad)

    col = lambda v: v.reshape(-1, 1).astype(f32)
    wcast = lambda w: w.astype(cdt)
    w_spec = lambda shape: pl.BlockSpec(shape, lambda n, p: (0, 0))
    img_spec = pl.BlockSpec((None, C_ip, TP), lambda n, p: (n, 0, p))
    psi_spec = pl.BlockSpec((None, 1, TP), lambda n, p: (n, 0, p))
    stat_spec = pl.BlockSpec((None, C_ip, 1), lambda n, p: (n, 0, 0))

    # ---- pass 1: psi + per-batch BN partial sums (no z written to HBM) -----
    psi_flat, zsum, zsumsq = pl.pallas_call(
        _make_main_kernel(P, TP),
        out_shape=(
            jax.ShapeDtypeStruct((N, 1, P_pad), f32),      # psi
            jax.ShapeDtypeStruct((N, C_ip, 1), f32),       # per-batch sum
            jax.ShapeDtypeStruct((N, C_ip, 1), f32),       # per-batch sum sq
        ),
        grid=(N, n_ptiles),
        in_specs=[
            img_spec, img_spec,
            w_spec((C_int, C_ip)), w_spec((C_int, 1)),
            w_spec((C_int, C_ip)), w_spec((C_int, 1)),
            w_spec((1, C_int)), w_spec((1, 1)),
            w_spec((C_ip, C_ip)), w_spec((C_ip, 1)),
        ],
        out_specs=(psi_spec, stat_spec, stat_spec),
        compiler_params=pltpu.CompilerParams(
            # Per-batch stats blocks -> batch axis is safe to shard across
            # v7x's two TensorCores; only the revisited pixel axis is
            # 'arbitrary'.
            dimension_semantics=("parallel", "arbitrary"),
            vmem_limit_bytes=vmem_limit),
    )(m1, m2,
      wcast(we1), col(be1), wcast(we2), col(be2),
      wcast(wpsi), col(bpsi), wcast(w11), col(b11))

    # Tiny per-channel scalar math: reduce batch partials, fold BN into conv.
    count = jnp.float32(N * P)
    tot = jnp.sum(zsum, axis=0)                            # (C_ip, 1)
    totsq = jnp.sum(zsumsq, axis=0)
    mean = tot / count
    var = jnp.maximum(totsq / count - mean * mean, 0.0)    # biased variance
    scale = gamma.reshape(-1, 1).astype(f32) * lax.rsqrt(var + eps)
    w11_fold = scale * w11.astype(f32)                     # row-scaled conv
    shift = (col(b11) - mean) * scale + beta.reshape(-1, 1).astype(f32)

    # ---- pass 2: recompute z from (map1, psi) and apply the folded affine ---
    result_flat = pl.pallas_call(
        _norm_kernel,
        out_shape=jax.ShapeDtypeStruct((N, C_ip, P_pad), out_dt),
        grid=(N, n_ptiles),
        in_specs=[img_spec, psi_spec,
                  w_spec((C_ip, C_ip)), w_spec((C_ip, 1))],
        out_specs=img_spec,
        compiler_params=pltpu.CompilerParams(
            dimension_semantics=("parallel", "parallel"),
            vmem_limit_bytes=vmem_limit),
    )(m1, psi_flat, w11_fold, shift)

    result = result_flat[:, :, :P].reshape(N, C_ip, H, W)
    psi_out = psi_flat[:, :, :P].reshape(N, 1, H, W)
    return result, psi_out


def _reference(map1, map2, we1, be1, we2, be2, wpsi, bpsi, w11, b11,
               gamma, beta, eps=1e-5):
    """Pure-JAX reference mirroring the PyTorch forward (train-mode BN)."""
    def conv1x1(x, w, b):
        return jnp.einsum('oc,nchw->nohw', w, x) + b[None, :, None, None]

    x1 = conv1x1(map1, we1, be1)
    x2 = conv1x1(map2, we2, be2)
    a = jnp.maximum(x1 + x2, 0.0)
    psi = jax.nn.sigmoid(conv1x1(a, wpsi, bpsi))
    z = conv1x1(psi * map1, w11, b11)
    mean = jnp.mean(z, axis=(0, 2, 3), keepdims=True)
    var = jnp.mean((z - mean) ** 2, axis=(0, 2, 3), keepdims=True)
    result = ((z - mean) * lax.rsqrt(var + eps)
              * gamma[None, :, None, None] + beta[None, :, None, None])
    return result, psi


if __name__ == "__main__":
    N, F_ip, F_int, H, W = 2, 4, 8, 16, 16

    key = jax.random.PRNGKey(0)
    ks = jax.random.split(key, 12)
    map1 = jax.random.normal(ks[0], (N, F_ip, H, W), jnp.float32)
    map2 = jax.random.normal(ks[1], (N, F_ip, H, W), jnp.float32)

    def u(k, shape, fan_in):
        bound = 1.0 / float(fan_in) ** 0.5
        return jax.random.uniform(k, shape, jnp.float32, -bound, bound)

    # Parameter shapes match nn.Conv2d(k=1) weights squeezed to (Cout, Cin).
    we1 = u(ks[2], (F_int, F_ip), F_ip);  be1 = u(ks[3], (F_int,), F_ip)
    we2 = u(ks[4], (F_int, F_ip), F_ip);  be2 = u(ks[5], (F_int,), F_ip)
    wpsi = u(ks[6], (1, F_int), F_int);   bpsi = u(ks[7], (1,), F_int)
    w11 = u(ks[8], (F_ip, F_ip), F_ip);   b11 = u(ks[9], (F_ip,), F_ip)
    gamma = 1.0 + 0.1 * jax.random.normal(ks[10], (F_ip,), jnp.float32)
    beta = 0.1 * jax.random.normal(ks[11], (F_ip,), jnp.float32)

    # ---- f32 path: exact semantics check against the reference -------------
    result, psi = jax.block_until_ready(
        asm_forward(map1, map2, we1, be1, we2, be2, wpsi, bpsi, w11, b11,
                    gamma, beta))
    assert result.shape == (N, F_ip, H, W), result.shape
    assert psi.shape == (N, 1, H, W), psi.shape

    r_ref, p_ref = jax.block_until_ready(
        _reference(map1, map2, we1, be1, we2, be2, wpsi, bpsi, w11, b11,
                   gamma, beta))
    assert jnp.allclose(psi, p_ref, atol=1e-4, rtol=1e-4), float(
        jnp.max(jnp.abs(psi - p_ref)))
    assert jnp.allclose(result, r_ref, atol=5e-3, rtol=5e-3), float(
        jnp.max(jnp.abs(result - r_ref)))

    # ---- bf16 fast path: half the HBM traffic; checked against a reference
    #      evaluated on the same bf16-quantized maps / projection weights ----
    q = lambda a: a.astype(jnp.bfloat16).astype(jnp.float32)
    m1b = map1.astype(jnp.bfloat16)
    m2b = map2.astype(jnp.bfloat16)
    result16, psi16 = jax.block_until_ready(
        asm_forward(m1b, m2b, we1, be1, we2, be2, wpsi, bpsi, w11, b11,
                    gamma, beta))
    assert result16.dtype == jnp.bfloat16, result16.dtype

    r_refq, p_refq = jax.block_until_ready(
        _reference(q(map1), q(map2), q(we1), be1, q(we2), be2,
                   q(wpsi), bpsi, w11, b11, gamma, beta))
    assert jnp.allclose(psi16, p_refq, atol=2e-2, rtol=2e-2), float(
        jnp.max(jnp.abs(psi16 - p_refq)))
    assert jnp.allclose(result16.astype(jnp.float32), r_refq,
                        atol=1e-1, rtol=1e-1), float(
        jnp.max(jnp.abs(result16.astype(jnp.float32) - r_refq)))

    print("KERNEL_OK")
</pallas_src>

<mosaic_0001>
module attributes {stable_mosaic.version = 11 : i64} {
  func.func @kernel(%arg0: i32, %arg1: i32, %arg2: memref<1x4x256xf32, #tpu.memory_space<vmem>>, %arg3: memref<1x4x256xf32, #tpu.memory_space<vmem>>, %arg4: memref<8x4xf32, #tpu.memory_space<vmem>>, %arg5: memref<8x1xf32, #tpu.memory_space<vmem>>, %arg6: memref<8x4xf32, #tpu.memory_space<vmem>>, %arg7: memref<8x1xf32, #tpu.memory_space<vmem>>, %arg8: memref<1x8xf32, #tpu.memory_space<vmem>>, %arg9: memref<1x1xf32, #tpu.memory_space<vmem>>, %arg10: memref<4x4xf32, #tpu.memory_space<vmem>>, %arg11: memref<4x1xf32, #tpu.memory_space<vmem>>, %arg12: memref<1x1x256xf32, #tpu.memory_space<vmem>>, %arg13: memref<1x4x1xf32, #tpu.memory_space<vmem>>, %arg14: memref<1x4x1xf32, #tpu.memory_space<vmem>>) attributes {dimension_semantics = [#tpu.dimension_semantics<parallel>, #tpu.dimension_semantics<arbitrary>], iteration_bounds = array<i64: 2, 1>, scalar_prefetch = 0 : i64, scratch_operands = 0 : i64, tpu.core_type = #tpu.core_type<tc>, window_params = [{transform_indices = @transform_0, window_bounds = array<i64: 1, 4, 256>}, {transform_indices = @transform_1, window_bounds = array<i64: 1, 4, 256>}, {pipeline_mode = #tpu.pipeline_mode<synchronous>, transform_indices = @transform_2, window_bounds = array<i64: 8, 4>}, {pipeline_mode = #tpu.pipeline_mode<synchronous>, transform_indices = @transform_3, window_bounds = array<i64: 8, 1>}, {pipeline_mode = #tpu.pipeline_mode<synchronous>, transform_indices = @transform_4, window_bounds = array<i64: 8, 4>}, {pipeline_mode = #tpu.pipeline_mode<synchronous>, transform_indices = @transform_5, window_bounds = array<i64: 8, 1>}, {pipeline_mode = #tpu.pipeline_mode<synchronous>, transform_indices = @transform_6, window_bounds = array<i64: 1, 8>}, {pipeline_mode = #tpu.pipeline_mode<synchronous>, transform_indices = @transform_7, window_bounds = array<i64: 1, 1>}, {pipeline_mode = #tpu.pipeline_mode<synchronous>, transform_indices = @transform_8, window_bounds = array<i64: 4, 4>}, {pipeline_mode = #tpu.pipeline_mode<synchronous>, transform_indices = @transform_9, window_bounds = array<i64: 4, 1>}, {transform_indices = @transform_10, window_bounds = array<i64: 1, 1, 256>}, {transform_indices = @transform_11, window_bounds = array<i64: 1, 4, 1>}, {transform_indices = @transform_12, window_bounds = array<i64: 1, 4, 1>}]} {
    %c0_i32 = arith.constant 0 : i32
    %0 = arith.cmpi eq, %arg1, %c0_i32 : i32
    %1 = arith.extui %0 : i1 to i32
    %c0_i32_0 = arith.constant 0 : i32
    %2 = arith.cmpi ne, %1, %c0_i32_0 : i32
    scf.if %2 {
      %cst_46 = arith.constant 0.000000e+00 : f32
      %59 = vector.broadcast %cst_46 : f32 to vector<4x1xf32>
      %c0_47 = arith.constant 0 : index
      %c0_48 = arith.constant 0 : index
      %c0_49 = arith.constant 0 : index
      %60 = vector.load %arg13[%c0_47, %c0_48, %c0_49] : memref<1x4x1xf32, #tpu.memory_space<vmem>>, vector<1x4x1xf32>
      %61 = vector.shape_cast %60 : vector<1x4x1xf32> to vector<4x1xf32>
      %62 = vector.shape_cast %59 : vector<4x1xf32> to vector<1x4x1xf32>
      tpu.vector_store %arg13[%c0_47, %c0_48, %c0_49], %62 {strides = array<i32>} : memref<1x4x1xf32, #tpu.memory_space<vmem>>, vector<1x4x1xf32>,
      %cst_50 = arith.constant 0.000000e+00 : f32
      %63 = vector.broadcast %cst_50 : f32 to vector<4x1xf32>
      %c0_51 = arith.constant 0 : index
      %c0_52 = arith.constant 0 : index
      %c0_53 = arith.constant 0 : index
      %64 = vector.load %arg14[%c0_51, %c0_52, %c0_53] : memref<1x4x1xf32, #tpu.memory_space<vmem>>, vector<1x4x1xf32>
      %65 = vector.shape_cast %64 : vector<1x4x1xf32> to vector<4x1xf32>
      %66 = vector.shape_cast %63 : vector<4x1xf32> to vector<1x4x1xf32>
      tpu.vector_store %arg14[%c0_51, %c0_52, %c0_53], %66 {strides = array<i32>} : memref<1x4x1xf32, #tpu.memory_space<vmem>>, vector<1x4x1xf32>,
    } else {
    }
    %c0 = arith.constant 0 : index
    %c0_1 = arith.constant 0 : index
    %c0_2 = arith.constant 0 : index
    %3 = vector.load %arg2[%c0, %c0_1, %c0_2] : memref<1x4x256xf32, #tpu.memory_space<vmem>>, vector<1x4x256xf32>
    %4 = vector.shape_cast %3 : vector<1x4x256xf32> to vector<4x256xf32>
    %c0_3 = arith.constant 0 : index
    %c0_4 = arith.constant 0 : index
    %c0_5 = arith.constant 0 : index
    %5 = vector.load %arg3[%c0_3, %c0_4, %c0_5] : memref<1x4x256xf32, #tpu.memory_space<vmem>>, vector<1x4x256xf32>
    %6 = vector.shape_cast %5 : vector<1x4x256xf32> to vector<4x256xf32>
    %c0_6 = arith.constant 0 : index
    %c0_7 = arith.constant 0 : index
    %7 = vector.load %arg4[%c0_6, %c0_7] : memref<8x4xf32, #tpu.memory_space<vmem>>, vector<8x4xf32>
    %cst = arith.constant dense<0.000000e+00> : vector<8x256xf32>
    %8 = tpu.matmul %7, %4, %cst {dimension_numbers = #tpu.dot_dimension_numbers<[1], [0], [0], [1], [0, 0, 1, 1], [], []>} : vector<8x4xf32>, vector<4x256xf32>, vector<8x256xf32> -> vector<8x256xf32>
    %c0_8 = arith.constant 0 : index
    %c0_9 = arith.constant 0 : index
    %9 = vector.load %arg5[%c0_8, %c0_9] : memref<8x1xf32, #tpu.memory_space<vmem>>, vector<8x1xf32>
    %10 = vector.broadcast %9 : vector<8x1xf32> to vector<8x256xf32>
    %11 = arith.addf %8, %10 : vector<8x256xf32>
    %c0_10 = arith.constant 0 : index
    %c0_11 = arith.constant 0 : index
    %12 = vector.load %arg6[%c0_10, %c0_11] : memref<8x4xf32, #tpu.memory_space<vmem>>, vector<8x4xf32>
    %cst_12 = arith.constant dense<0.000000e+00> : vector<8x256xf32>
    %13 = tpu.matmul %12, %6, %cst_12 {dimension_numbers = #tpu.dot_dimension_numbers<[1], [0], [0], [1], [0, 0, 1, 1], [], []>} : vector<8x4xf32>, vector<4x256xf32>, vector<8x256xf32> -> vector<8x256xf32>
    %c0_13 = arith.constant 0 : index
    %c0_14 = arith.constant 0 : index
    %14 = vector.load %arg7[%c0_13, %c0_14] : memref<8x1xf32, #tpu.memory_space<vmem>>, vector<8x1xf32>
    %15 = vector.broadcast %14 : vector<8x1xf32> to vector<8x256xf32>
    %16 = arith.addf %13, %15 : vector<8x256xf32>
    %17 = arith.addf %11, %16 : vector<8x256xf32>
    %cst_15 = arith.constant 0.000000e+00 : f32
    %18 = vector.broadcast %cst_15 : f32 to vector<8x256xf32>
    %19 = arith.maximumf %17, %18 : vector<8x256xf32>
    %c0_16 = arith.constant 0 : index
    %c0_17 = arith.constant 0 : index
    %20 = vector.load %arg8[%c0_16, %c0_17] : memref<1x8xf32, #tpu.memory_space<vmem>>, vector<1x8xf32>
    %cst_18 = arith.constant dense<0.000000e+00> : vector<1x256xf32>
    %21 = tpu.matmul %20, %19, %cst_18 {dimension_numbers = #tpu.dot_dimension_numbers<[1], [0], [0], [1], [0, 0, 1, 1], [], []>} : vector<1x8xf32>, vector<8x256xf32>, vector<1x256xf32> -> vector<1x256xf32>
    %c0_19 = arith.constant 0 : index
    %c0_20 = arith.constant 0 : index
    %22 = vector.load %arg9[%c0_19, %c0_20] : memref<1x1xf32, #tpu.memory_space<vmem>>, vector<1x1xf32>
    %23 = vector.broadcast %22 : vector<1x1xf32> to vector<1x256xf32>
    %24 = arith.addf %21, %23 : vector<1x256xf32>
    %cst_21 = arith.constant 0.000000e+00 : f32
    %25 = vector.broadcast %cst_21 : f32 to vector<1x256xf32>
    %26 = arith.subf %25, %24 : vector<1x256xf32>
    %27 = math.exp %26 : vector<1x256xf32>
    %cst_22 = arith.constant 1.000000e+00 : f32
    %28 = vector.broadcast %cst_22 : f32 to vector<1x256xf32>
    %29 = arith.addf %28, %27 : vector<1x256xf32>
    %cst_23 = arith.constant 1.000000e+00 : f32
    %30 = vector.broadcast %cst_23 : f32 to vector<1x256xf32>
    %31 = arith.divf %30, %29 : vector<1x256xf32>
    %32 = vector.broadcast %31 : vector<1x256xf32> to vector<4x256xf32>
    %33 = arith.mulf %32, %4 : vector<4x256xf32>
    %c0_24 = arith.constant 0 : index
    %c0_25 = arith.constant 0 : index
    %34 = vector.load %arg10[%c0_24, %c0_25] : memref<4x4xf32, #tpu.memory_space<vmem>>, vector<4x4xf32>
    %cst_26 = arith.constant dense<0.000000e+00> : vector<4x256xf32>
    %35 = tpu.matmul %34, %33, %cst_26 {dimension_numbers = #tpu.dot_dimension_numbers<[1], [0], [0], [1], [0, 0, 1, 1], [], []>} : vector<4x4xf32>, vector<4x256xf32>, vector<4x256xf32> -> vector<4x256xf32>
    %c0_27 = arith.constant 0 : index
    %c0_28 = arith.constant 0 : index
    %36 = vector.load %arg11[%c0_27, %c0_28] : memref<4x1xf32, #tpu.memory_space<vmem>>, vector<4x1xf32>
    %37 = vector.broadcast %36 : vector<4x1xf32> to vector<4x256xf32>
    %38 = arith.addf %35, %37 : vector<4x256xf32>
    %c0_29 = arith.constant 0 : index
    %c0_30 = arith.constant 0 : index
    %c0_31 = arith.constant 0 : index
    %39 = vector.load %arg12[%c0_29, %c0_30, %c0_31] : memref<1x1x256xf32, #tpu.memory_space<vmem>>, vector<1x1x256xf32>
    %40 = vector.shape_cast %39 : vector<1x1x256xf32> to vector<1x256xf32>
    %41 = vector.shape_cast %31 : vector<1x256xf32> to vector<1x1x256xf32>
    tpu.vector_store %arg12[%c0_29, %c0_30, %c0_31], %41 {strides = array<i32>} : memref<1x1x256xf32, #tpu.memory_space<vmem>>, vector<1x1x256xf32>,
    %c0_32 = arith.constant 0 : index
    %c0_33 = arith.constant 0 : index
    %c0_34 = arith.constant 0 : index
    %42 = vector.load %arg13[%c0_32, %c0_33, %c0_34] : memref<1x4x1xf32, #tpu.memory_space<vmem>>, vector<1x4x1xf32>
    %43 = vector.shape_cast %42 : vector<1x4x1xf32> to vector<4x1xf32>
    %cst_35 = arith.constant dense<0.000000e+00> : vector<4xf32>
    %44 = vector.multi_reduction <add>, %38, %cst_35 [1] : vector<4x256xf32> to vector<4xf32>
    %45 = vector.shape_cast %44 : vector<4xf32> to vector<4x1xf32>
    %46 = arith.addf %43, %45 : vector<4x1xf32>
    %c0_36 = arith.constant 0 : index
    %c0_37 = arith.constant 0 : index
    %c0_38 = arith.constant 0 : index
    %47 = vector.load %arg13[%c0_36, %c0_37, %c0_38] : memref<1x4x1xf32, #tpu.memory_space<vmem>>, vector<1x4x1xf32>
    %48 = vector.shape_cast %47 : vector<1x4x1xf32> to vector<4x1xf32>
    %49 = vector.shape_cast %46 : vector<4x1xf32> to vector<1x4x1xf32>
    tpu.vector_store %arg13[%c0_36, %c0_37, %c0_38], %49 {strides = array<i32>} : memref<1x4x1xf32, #tpu.memory_space<vmem>>, vector<1x4x1xf32>,
    %c0_39 = arith.constant 0 : index
    %c0_40 = arith.constant 0 : index
    %c0_41 = arith.constant 0 : index
    %50 = vector.load %arg14[%c0_39, %c0_40, %c0_41] : memref<1x4x1xf32, #tpu.memory_space<vmem>>, vector<1x4x1xf32>
    %51 = vector.shape_cast %50 : vector<1x4x1xf32> to vector<4x1xf32>
    %52 = arith.mulf %38, %38 : vector<4x256xf32>
    %cst_42 = arith.constant dense<0.000000e+00> : vector<4xf32>
    %53 = vector.multi_reduction <add>, %52, %cst_42 [1] : vector<4x256xf32> to vector<4xf32>
    %54 = vector.shape_cast %53 : vector<4xf32> to vector<4x1xf32>
    %55 = arith.addf %51, %54 : vector<4x1xf32>
    %c0_43 = arith.constant 0 : index
    %c0_44 = arith.constant 0 : index
    %c0_45 = arith.constant 0 : index
    %56 = vector.load %arg14[%c0_43, %c0_44, %c0_45] : memref<1x4x1xf32, #tpu.memory_space<vmem>>, vector<1x4x1xf32>
    %57 = vector.shape_cast %56 : vector<1x4x1xf32> to vector<4x1xf32>
    %58 = vector.shape_cast %55 : vector<4x1xf32> to vector<1x4x1xf32>
    tpu.vector_store %arg14[%c0_43, %c0_44, %c0_45], %58 {strides = array<i32>} : memref<1x4x1xf32, #tpu.memory_space<vmem>>, vector<1x4x1xf32>,
    return
  }
  func.func @transform_0(%arg0: i32, %arg1: i32) -> (i32, i32, i32) {
    %c0_i32 = arith.constant 0 : i32
    %c0_i32_0 = arith.constant 0 : i32
    return %arg0, %c0_i32, %arg1 : i32, i32, i32
  }
  func.func @transform_1(%arg0: i32, %arg1: i32) -> (i32, i32, i32) {
    %c0_i32 = arith.constant 0 : i32
    %c0_i32_0 = arith.constant 0 : i32
    return %arg0, %c0_i32, %arg1 : i32, i32, i32
  }
  func.func @transform_2(%arg0: i32, %arg1: i32) -> (i32, i32) {
    %c0_i32 = arith.constant 0 : i32
    %c0_i32_0 = arith.constant 0 : i32
    %c0_i32_1 = arith.constant 0 : i32
    return %c0_i32, %c0_i32_0 : i32, i32
  }
  func.func @transform_3(%arg0: i32, %arg1: i32) -> (i32, i32) {
    %c0_i32 = arith.constant 0 : i32
    %c0_i32_0 = arith.constant 0 : i32
    %c0_i32_1 = arith.constant 0 : i32
    return %c0_i32, %c0_i32_0 : i32, i32
  }
  func.func @transform_4(%arg0: i32, %arg1: i32) -> (i32, i32) {
    %c0_i32 = arith.constant 0 : i32
    %c0_i32_0 = arith.constant 0 : i32
    %c0_i32_1 = arith.constant 0 : i32
    return %c0_i32, %c0_i32_0 : i32, i32
  }
  func.func @transform_5(%arg0: i32, %arg1: i32) -> (i32, i32) {
    %c0_i32 = arith.constant 0 : i32
    %c0_i32_0 = arith.constant 0 : i32
    %c0_i32_1 = arith.constant 0 : i32
    return %c0_i32, %c0_i32_0 : i32, i32
  }
  func.func @transform_6(%arg0: i32, %arg1: i32) -> (i32, i32) {
    %c0_i32 = arith.constant 0 : i32
    %c0_i32_0 = arith.constant 0 : i32
    %c0_i32_1 = arith.constant 0 : i32
    return %c0_i32, %c0_i32_0 : i32, i32
  }
  func.func @transform_7(%arg0: i32, %arg1: i32) -> (i32, i32) {
    %c0_i32 = arith.constant 0 : i32
    %c0_i32_0 = arith.constant 0 : i32
    %c0_i32_1 = arith.constant 0 : i32
    return %c0_i32, %c0_i32_0 : i32, i32
  }
  func.func @transform_8(%arg0: i32, %arg1: i32) -> (i32, i32) {
    %c0_i32 = arith.constant 0 : i32
    %c0_i32_0 = arith.constant 0 : i32
    %c0_i32_1 = arith.constant 0 : i32
    return %c0_i32, %c0_i32_0 : i32, i32
  }
  func.func @transform_9(%arg0: i32, %arg1: i32) -> (i32, i32) {
    %c0_i32 = arith.constant 0 : i32
    %c0_i32_0 = arith.constant 0 : i32
    %c0_i32_1 = arith.constant 0 : i32
    return %c0_i32, %c0_i32_0 : i32, i32
  }
  func.func @transform_10(%arg0: i32, %arg1: i32) -> (i32, i32, i32) {
    %c0_i32 = arith.constant 0 : i32
    %c0_i32_0 = arith.constant 0 : i32
    return %arg0, %c0_i32, %arg1 : i32, i32, i32
  }
  func.func @transform_11(%arg0: i32, %arg1: i32) -> (i32, i32, i32) {
    %c0_i32 = arith.constant 0 : i32
    %c0_i32_0 = arith.constant 0 : i32
    %c0_i32_1 = arith.constant 0 : i32
    return %arg0, %c0_i32, %c0_i32_0 : i32, i32, i32
  }
  func.func @transform_12(%arg0: i32, %arg1: i32) -> (i32, i32, i32) {
    %c0_i32 = arith.constant 0 : i32
    %c0_i32_0 = arith.constant 0 : i32
    %c0_i32_1 = arith.constant 0 : i32
    return %arg0, %c0_i32, %c0_i32_0 : i32, i32, i32
  }
}

</mosaic_0001>

<llo_original>
// kernel: tpu_custom_call.1
$region0: #{tpu_custom_call.1}
  #allocation0 [shape = 'u32[]', space=smem, size = 0x4, offset = 0x4, fixed_abs, tag = 'smem constant byte address 0x4 - core index']
  #allocation1 [shape = 'u32[144,128]{1,0:T(1,128)}', space=vmem, size = 0x12000, scoped, tag = 'internal scratch']
  #allocation2 [shape = 'f32[1,1]{1,0:T(1,128)S(1)}', space=vmem, size = 0x200, scoped, tag = 'scoped memory for tpu_custom_call.1']
  %s0 = inlined_call_operand.vmem [shape: f32[2,4,256], index: 0, kind: input, shape index: {}]
  %s1 = inlined_call_operand.vmem [shape: f32[2,4,256], index: 1, kind: input, shape index: {}]
  %s2 = inlined_call_operand.vmem [shape: f32[8,4], index: 2, kind: input, shape index: {}]
  %s3 = inlined_call_operand.vmem [shape: f32[8,1], index: 3, kind: input, shape index: {}]
  %s4 = inlined_call_operand.vmem [shape: f32[8,4], index: 4, kind: input, shape index: {}]
  %s5 = inlined_call_operand.vmem [shape: f32[8,1], index: 5, kind: input, shape index: {}]
  %s6 = inlined_call_operand.vmem [shape: f32[1,8], index: 6, kind: input, shape index: {}]
  %s7 = inlined_call_operand.<no memory space> [shape: f32[1,1], index: 7, kind: input, shape index: {}]
  %s8 = inlined_call_operand.vmem [shape: f32[4,4], index: 8, kind: input, shape index: {}]
  %s9 = inlined_call_operand.vmem [shape: f32[4,1], index: 9, kind: input, shape index: {}]
  %s10 = inlined_call_operand.hbm [shape: f32[2,1,256], index: 10, kind: output, shape index: {0}]
  %s11 = inlined_call_operand.vmem [shape: f32[2,4,1], index: 11, kind: output, shape index: {1}]
  %s12 = inlined_call_operand.vmem [shape: f32[2,4,1], index: 12, kind: output, shape index: {2}]
  %13 = xla_tuple %s10, %s11, %s12
  %s14 = sld [smem:[#allocation0]]
  $region93: #{tpu_custom_call.1} parent=0
    _
  %s16 = ssub.s32 1, %s14
  %s17 = scalar_select 0, %s16, %s14
  %v18 = vstv %s7
  %19 = vst [vmem:[#allocation2] sm:$0x1] %v18
  $region1: #{tpu_custom_call.1} parent=0
    #allocation3 [shape = 'u8[2048]{0}', space=vmem, size = 0x800, scoped, tag = 'output window, operand 0']
    #allocation4 [shape = 's32[2]{0}', space=sflag, size = 0x8, scoped, tag = 'scoped memory for tpu_custom_call.1']
    %20 = vsyncpa [#allocation4], 0
    %s21 = scalar_lea.sflag [#allocation4], 1
    %22 = vsyncpa %s21, 0
    loop: start=0, step=1, limit=4
    $region2: #{tpu_custom_call.1} parent=1 // loop_pre_header
      _
    $region3: #{tpu_custom_call.1} parent=1 // loop_header
      %s24 = sphi 0, %s28
      %p25 = scmp.ge.s32.totalorder %s24, 4
      %s31 = sphi 0, %s43
      %s32 = sphi 0, %s39
      %s33 = sphi 0, %s31
      %s34 = sphi 0, %s32
      %s35 = sphi 0, %s33
      %s36 = sphi 0, %s34
      %s48 = sphi 0, %s50
      %s51 = sphi 0, %s48
      %s52 = sphi 0, %s51
      %s68 = sphi 0, %s52
      %s76 = sphi 0, %s78
      %s79 = sphi 0, %s76
      %s80 = sphi 0, %s79
      %s96 = sphi 0, %s80
      %s100 = sphi 0, %s100
      %s102 = sphi 0, %s100
      %s103 = sphi 0, %s102
      %s117 = sphi 0, %s103
      %s121 = sphi 0, %s121
      %s123 = sphi 0, %s121
      %s124 = sphi 0, %s123
      %s138 = sphi 0, %s124
      %s142 = sphi 0, %s142
      %s144 = sphi 0, %s142
      %s145 = sphi 0, %s144
      %s159 = sphi 0, %s145
      %s163 = sphi 0, %s163
      %s165 = sphi 0, %s163
      %s166 = sphi 0, %s165
      %s180 = sphi 0, %s166
      %s184 = sphi 0, %s184
      %s186 = sphi 0, %s184
      %s187 = sphi 0, %s186
      %s201 = sphi 0, %s187
      %s205 = sphi 0, %s205
      %s207 = sphi 0, %s205
      %s208 = sphi 0, %s207
      %s222 = sphi 0, %s208
      %s226 = sphi 0, %s226
      %s228 = sphi 0, %s226
      %s229 = sphi 0, %s228
      %s243 = sphi 0, %s229
      %s247 = sphi 0, %s247
      %s249 = sphi 0, %s247
      %s250 = sphi 0, %s249
      %s264 = sphi 0, %s250
      %s272 = sphi 0, %s274
      %s275 = sphi 0, %s272
      %s276 = sphi 0, %s275
      %s292 = sphi 0, %s276
      %s298 = sphi 0, %s300
      %s301 = sphi 0, %s298
      %s302 = sphi 0, %s301
      %s318 = sphi 0, %s302
      %s324 = sphi 0, %s326
      %s327 = sphi 0, %s324
      %s328 = sphi 0, %s327
      %s344 = sphi 0, %s328
    $region4: #{tpu_custom_call.1} parent=1 // loop_header_branch
      %27 = sbr.rel (%p25) target = $region8
    $region5: #{tpu_custom_call.1} parent=1 // loop_body
      %s29 = ssub.s32 %s24, 1
      %s30 = ssub.s32 %s24, 2
      %s37 = sadd.s32 1, %s32
      %p38 = scmp.ge.s32.totalorder %s37, 1
      %s39 = scalar_select %p38, 0, %s37
      %s40 = sadd.s32 1, %s31
      %s41 = scalar_select %p38, %s40, %s31
      %p42 = scmp.ge.s32.totalorder %s41, 2
      %s43 = scalar_select %p42, 0, %s41
      %s44 = ssub.s32 %s31, %s43
      %s45 = ssub.s32 %s32, %s39
      %s46 = sor.u32 %s44, %s45
      %p47 = scmp.eq.s32.totalorder %s46, 0
      %s49 = sadd.s32 %s48, 1
      %s50 = scalar_select %p47, %s48, %s49
      %p53 = pneg %p47
      %p54 = scmp.eq.s32.totalorder %s24, 1
      %p55 = por %p53, %p54
      %p56 = scmp.ne.s32.totalorder %s48, %s51
      %p57 = scmp.eq.s32.totalorder %s24, 0
      %p58 = por %p56, %p57
      %p59 = scmp.ne.s32.totalorder %s48, %s51
      %p60 = scmp.eq.s32.totalorder %s29, 1
      %p61 = por %p59, %p60
      %p62 = scmp.ne.s32.totalorder %s51, %s52
      %p63 = scmp.eq.s32.totalorder %s29, 0
      %p64 = por %p62, %p63
      %p65 = scmp.ne.s32.totalorder %s51, %s52
      %p66 = scmp.eq.s32.totalorder %s30, 1
      %p67 = por %p65, %p66
      %p69 = scmp.ne.s32.totalorder %s52, %s68
      %p70 = scmp.eq.s32.totalorder %s30, 0
      %p71 = por %p69, %p70
      %s72 = ssub.s32 %s31, %s43
      %s73 = ssub.s32 %s32, %s39
      %s74 = sor.u32 %s72, %s73
      %p75 = scmp.eq.s32.totalorder %s74, 0
      %s77 = sadd.s32 %s76, 1
      %s78 = scalar_select %p75, %s76, %s77
      %p81 = pneg %p75
      %p82 = scmp.eq.s32.totalorder %s24, 1
      %p83 = por %p81, %p82
      %p84 = scmp.ne.s32.totalorder %s76, %s79
      %p85 = scmp.eq.s32.totalorder %s24, 0
      %p86 = por %p84, %p85
      %p87 = scmp.ne.s32.totalorder %s76, %s79
      %p88 = scmp.eq.s32.totalorder %s29, 1
      %p89 = por %p87, %p88
      %p90 = scmp.ne.s32.totalorder %s79, %s80
      %p91 = scmp.eq.s32.totalorder %s29, 0
      %p92 = por %p90, %p91
      %p93 = scmp.ne.s32.totalorder %s79, %s80
      %p94 = scmp.eq.s32.totalorder %s30, 1
      %p95 = por %p93, %p94
      %p97 = scmp.ne.s32.totalorder %s80, %s96
      %p98 = scmp.eq.s32.totalorder %s30, 0
      %p99 = por %p97, %p98
      %s101 = sadd.s32 %s100, 1
      %p104 = scmp.eq.s32.totalorder %s24, 1
      %p105 = scmp.ne.s32.totalorder %s100, %s102
      %p106 = scmp.eq.s32.totalorder %s24, 0
      %p107 = por %p105, %p106
      %p108 = scmp.ne.s32.totalorder %s100, %s102
      %p109 = scmp.eq.s32.totalorder %s29, 1
      %p110 = por %p108, %p109
      %p111 = scmp.ne.s32.totalorder %s102, %s103
      %p112 = scmp.eq.s32.totalorder %s29, 0
      %p113 = por %p111, %p112
      %p114 = scmp.ne.s32.totalorder %s102, %s103
      %p115 = scmp.eq.s32.totalorder %s30, 1
      %p116 = por %p114, %p115
      %p118 = scmp.ne.s32.totalorder %s103, %s117
      %p119 = scmp.eq.s32.totalorder %s30, 0
      %p120 = por %p118, %p119
      %s122 = sadd.s32 %s121, 1
      %p125 = scmp.eq.s32.totalorder %s24, 1
      %p126 = scmp.ne.s32.totalorder %s121, %s123
      %p127 = scmp.eq.s32.totalorder %s24, 0
      %p128 = por %p126, %p127
      %p129 = scmp.ne.s32.totalorder %s121, %s123
      %p130 = scmp.eq.s32.totalorder %s29, 1
      %p131 = por %p129, %p130
      %p132 = scmp.ne.s32.totalorder %s123, %s124
      %p133 = scmp.eq.s32.totalorder %s29, 0
      %p134 = por %p132, %p133
      %p135 = scmp.ne.s32.totalorder %s123, %s124
      %p136 = scmp.eq.s32.totalorder %s30, 1
      %p137 = por %p135, %p136
      %p139 = scmp.ne.s32.totalorder %s124, %s138
      %p140 = scmp.eq.s32.totalorder %s30, 0
      %p141 = por %p139, %p140
      %s143 = sadd.s32 %s142, 1
      %p146 = scmp.eq.s32.totalorder %s24, 1
      %p147 = scmp.ne.s32.totalorder %s142, %s144
      %p148 = scmp.eq.s32.totalorder %s24, 0
      %p149 = por %p147, %p148
      %p150 = scmp.ne.s32.totalorder %s142, %s144
      %p151 = scmp.eq.s32.totalorder %s29, 1
      %p152 = por %p150, %p151
      %p153 = scmp.ne.s32.totalorder %s144, %s145
      %p154 = scmp.eq.s32.totalorder %s29, 0
      %p155 = por %p153, %p154
      %p156 = scmp.ne.s32.totalorder %s144, %s145
      %p157 = scmp.eq.s32.totalorder %s30, 1
      %p158 = por %p156, %p157
      %p160 = scmp.ne.s32.totalorder %s145, %s159
      %p161 = scmp.eq.s32.totalorder %s30, 0
      %p162 = por %p160, %p161
      %s164 = sadd.s32 %s163, 1
      %p167 = scmp.eq.s32.totalorder %s24, 1
      %p168 = scmp.ne.s32.totalorder %s163, %s165
      %p169 = scmp.eq.s32.totalorder %s24, 0
      %p170 = por %p168, %p169
      %p171 = scmp.ne.s32.totalorder %s163, %s165
      %p172 = scmp.eq.s32.totalorder %s29, 1
      %p173 = por %p171, %p172
      %p174 = scmp.ne.s32.totalorder %s165, %s166
      %p175 = scmp.eq.s32.totalorder %s29, 0
      %p176 = por %p174, %p175
      %p177 = scmp.ne.s32.totalorder %s165, %s166
      %p178 = scmp.eq.s32.totalorder %s30, 1
      %p179 = por %p177, %p178
      %p181 = scmp.ne.s32.totalorder %s166, %s180
      %p182 = scmp.eq.s32.totalorder %s30, 0
      %p183 = por %p181, %p182
      %s185 = sadd.s32 %s184, 1
      %p188 = scmp.eq.s32.totalorder %s24, 1
      %p189 = scmp.ne.s32.totalorder %s184, %s186
      %p190 = scmp.eq.s32.totalorder %s24, 0
      %p191 = por %p189, %p190
      %p192 = scmp.ne.s32.totalorder %s184, %s186
      %p193 = scmp.eq.s32.totalorder %s29, 1
      %p194 = por %p192, %p193
      %p195 = scmp.ne.s32.totalorder %s186, %s187
      %p196 = scmp.eq.s32.totalorder %s29, 0
      %p197 = por %p195, %p196
      %p198 = scmp.ne.s32.totalorder %s186, %s187
      %p199 = scmp.eq.s32.totalorder %s30, 1
      %p200 = por %p198, %p199
      %p202 = scmp.ne.s32.totalorder %s187, %s201
      %p203 = scmp.eq.s32.totalorder %s30, 0
      %p204 = por %p202, %p203
      %s206 = sadd.s32 %s205, 1
      %p209 = scmp.eq.s32.totalorder %s24, 1
      %p210 = scmp.ne.s32.totalorder %s205, %s207
      %p211 = scmp.eq.s32.totalorder %s24, 0
      %p212 = por %p210, %p211
      %p213 = scmp.ne.s32.totalorder %s205, %s207
      %p214 = scmp.eq.s32.totalorder %s29, 1
      %p215 = por %p213, %p214
      %p216 = scmp.ne.s32.totalorder %s207, %s208
      %p217 = scmp.eq.s32.totalorder %s29, 0
      %p218 = por %p216, %p217
      %p219 = scmp.ne.s32.totalorder %s207, %s208
      %p220 = scmp.eq.s32.totalorder %s30, 1
      %p221 = por %p219, %p220
      %p223 = scmp.ne.s32.totalorder %s208, %s222
      %p224 = scmp.eq.s32.totalorder %s30, 0
      %p225 = por %p223, %p224
      %s227 = sadd.s32 %s226, 1
      %p230 = scmp.eq.s32.totalorder %s24, 1
      %p231 = scmp.ne.s32.totalorder %s226, %s228
      %p232 = scmp.eq.s32.totalorder %s24, 0
      %p233 = por %p231, %p232
      %p234 = scmp.ne.s32.totalorder %s226, %s228
      %p235 = scmp.eq.s32.totalorder %s29, 1
      %p236 = por %p234, %p235
      %p237 = scmp.ne.s32.totalorder %s228, %s229
      %p238 = scmp.eq.s32.totalorder %s29, 0
      %p239 = por %p237, %p238
      %p240 = scmp.ne.s32.totalorder %s228, %s229
      %p241 = scmp.eq.s32.totalorder %s30, 1
      %p242 = por %p240, %p241
      %p244 = scmp.ne.s32.totalorder %s229, %s243
      %p245 = scmp.eq.s32.totalorder %s30, 0
      %p246 = por %p244, %p245
      %s248 = sadd.s32 %s247, 1
      %p251 = scmp.eq.s32.totalorder %s24, 1
      %p252 = scmp.ne.s32.totalorder %s247, %s249
      %p253 = scmp.eq.s32.totalorder %s24, 0
      %p254 = por %p252, %p253
      %p255 = scmp.ne.s32.totalorder %s247, %s249
      %p256 = scmp.eq.s32.totalorder %s29, 1
      %p257 = por %p255, %p256
      %p258 = scmp.ne.s32.totalorder %s249, %s250
      %p259 = scmp.eq.s32.totalorder %s29, 0
      %p260 = por %p258, %p259
      %p261 = scmp.ne.s32.totalorder %s249, %s250
      %p262 = scmp.eq.s32.totalorder %s30, 1
      %p263 = por %p261, %p262
      %p265 = scmp.ne.s32.totalorder %s250, %s264
      %p266 = scmp.eq.s32.totalorder %s30, 0
      %p267 = por %p265, %p266
      %s268 = ssub.s32 %s31, %s43
      %s269 = ssub.s32 %s32, %s39
      %s270 = sor.u32 %s268, %s269
      %p271 = scmp.eq.s32.totalorder %s270, 0
      %s273 = sadd.s32 %s272, 1
      %s274 = scalar_select %p271, %s272, %s273
      %p277 = pneg %p271
      %p278 = scmp.eq.s32.totalorder %s24, 1
      %p279 = por %p277, %p278
      %p280 = scmp.ne.s32.totalorder %s272, %s275
      %p281 = scmp.eq.s32.totalorder %s24, 0
      %p282 = por %p280, %p281
      %p283 = scmp.ne.s32.totalorder %s272, %s275
      %p284 = scmp.eq.s32.totalorder %s29, 1
      %p285 = por %p283, %p284
      %p286 = scmp.ne.s32.totalorder %s275, %s276
      %p287 = scmp.eq.s32.totalorder %s29, 0
      %p288 = por %p286, %p287
      %p289 = scmp.ne.s32.totalorder %s275, %s276
      %p290 = scmp.eq.s32.totalorder %s30, 1
      %p291 = por %p289, %p290
      %p293 = scmp.ne.s32.totalorder %s276, %s292
      %p294 = scmp.eq.s32.totalorder %s30, 0
      %p295 = por %p293, %p294
      %s296 = ssub.s32 %s31, %s43
      %p297 = scmp.eq.s32.totalorder %s296, 0
      %s299 = sadd.s32 %s298, 1
      %s300 = scalar_select %p297, %s298, %s299
      %p303 = pneg %p297
      %p304 = scmp.eq.s32.totalorder %s24, 1
      %p305 = por %p303, %p304
      %p306 = scmp.ne.s32.totalorder %s298, %s301
      %p307 = scmp.eq.s32.totalorder %s24, 0
      %p308 = por %p306, %p307
      %p309 = scmp.ne.s32.totalorder %s298, %s301
      %p310 = scmp.eq.s32.totalorder %s29, 1
      %p311 = por %p309, %p310
      %p312 = scmp.ne.s32.totalorder %s301, %s302
      %p313 = scmp.eq.s32.totalorder %s29, 0
      %p314 = por %p312, %p313
      %p315 = scmp.ne.s32.totalorder %s301, %s302
      %p316 = scmp.eq.s32.totalorder %s30, 1
      %p317 = por %p315, %p316
      %p319 = scmp.ne.s32.totalorder %s302, %s318
      %p320 = scmp.eq.s32.totalorder %s30, 0
      %p321 = por %p319, %p320
      %s322 = ssub.s32 %s31, %s43
      %p323 = scmp.eq.s32.totalorder %s322, 0
      %s325 = sadd.s32 %s324, 1
      %s326 = scalar_select %p323, %s324, %s325
      %p329 = pneg %p323
      %p330 = scmp.eq.s32.totalorder %s24, 1
      %p331 = por %p329, %p330
      %p332 = scmp.ne.s32.totalorder %s324, %s327
      %p333 = scmp.eq.s32.totalorder %s24, 0
      %p334 = por %p332, %p333
      %p335 = scmp.ne.s32.totalorder %s324, %s327
      %p336 = scmp.eq.s32.totalorder %s29, 1
      %p337 = por %p335, %p336
      %p338 = scmp.ne.s32.totalorder %s327, %s328
      %p339 = scmp.eq.s32.totalorder %s29, 0
      %p340 = por %p338, %p339
      %p341 = scmp.ne.s32.totalorder %s327, %s328
      %p342 = scmp.eq.s32.totalorder %s30, 1
      %p343 = por %p341, %p342
      %p345 = scmp.ne.s32.totalorder %s328, %s344
      %p346 = scmp.eq.s32.totalorder %s30, 0
      %p347 = por %p345, %p346
      %p348 = scmp.le.s32.totalorder 1, %s24
      %p349 = scmp.lt.s32.totalorder %s24, 3
      %p350 = pnand %p348, %p349
      %p351 = pneg %p350
      // Predicated region
      $region9: #{tpu_custom_call.1} parent=5 // pred_check
        _
      $region10: #{tpu_custom_call.1} parent=5 // pred_check_branch
        %353 = sbr.rel (%p350) target = $region12
      $region11: #{tpu_custom_call.1} parent=5 // pred_region
        %s354 = ssub.s32 %s24, 1
        // Predicated region
        $region13: #{tpu_custom_call.1} parent=11 // pred_check
          %p355 = pneg %p113
        $region14: #{tpu_custom_call.1} parent=11 // pred_check_branch
          %357 = sbr.rel (%p355) target = $region16
        $region15: #{tpu_custom_call.1} parent=11 // pred_region
          _
        $region16: #{tpu_custom_call.1} parent=11 // pred_fallthru
          _
        // Predicated region
        $region17: #{tpu_custom_call.1} parent=11 // pred_check
          %p358 = pneg %p134
        $region18: #{tpu_custom_call.1} parent=11 // pred_check_branch
          %360 = sbr.rel (%p358) target = $region20
        $region19: #{tpu_custom_call.1} parent=11 // pred_region
          _
        $region20: #{tpu_custom_call.1} parent=11 // pred_fallthru
          _
        // Predicated region
        $region21: #{tpu_custom_call.1} parent=11 // pred_check
          %p361 = pneg %p155
        $region22: #{tpu_custom_call.1} parent=11 // pred_check_branch
          %363 = sbr.rel (%p361) target = $region24
        $region23: #{tpu_custom_call.1} parent=11 // pred_region
          _
        $region24: #{tpu_custom_call.1} parent=11 // pred_fallthru
          _
        // Predicated region
        $region25: #{tpu_custom_call.1} parent=11 // pred_check
          %p364 = pneg %p176
        $region26: #{tpu_custom_call.1} parent=11 // pred_check_branch
          %366 = sbr.rel (%p364) target = $region28
        $region27: #{tpu_custom_call.1} parent=11 // pred_region
          _
        $region28: #{tpu_custom_call.1} parent=11 // pred_fallthru
          _
        // Predicated region
        $region29: #{tpu_custom_call.1} parent=11 // pred_check
          %p367 = pneg %p197
        $region30: #{tpu_custom_call.1} parent=11 // pred_check_branch
          %369 = sbr.rel (%p367) target = $region32
        $region31: #{tpu_custom_call.1} parent=11 // pred_region
          _
        $region32: #{tpu_custom_call.1} parent=11 // pred_fallthru
          _
        // Predicated region
        $region33: #{tpu_custom_call.1} parent=11 // pred_check
          %p370 = pneg %p218
        $region34: #{tpu_custom_call.1} parent=11 // pred_check_branch
          %372 = sbr.rel (%p370) target = $region36
        $region35: #{tpu_custom_call.1} parent=11 // pred_region
          _
        $region36: #{tpu_custom_call.1} parent=11 // pred_fallthru
          _
        // Predicated region
        $region37: #{tpu_custom_call.1} parent=11 // pred_check
          %p373 = pneg %p239
        $region38: #{tpu_custom_call.1} parent=11 // pred_check_branch
          %375 = sbr.rel (%p373) target = $region40
        $region39: #{tpu_custom_call.1} parent=11 // pred_region
          _
        $region40: #{tpu_custom_call.1} parent=11 // pred_fallthru
          _
        // Predicated region
        $region41: #{tpu_custom_call.1} parent=11 // pred_check
          %p376 = pneg %p260
        $region42: #{tpu_custom_call.1} parent=11 // pred_check_branch
          %378 = sbr.rel (%p376) target = $region44
        $region43: #{tpu_custom_call.1} parent=11 // pred_region
          _
        $region44: #{tpu_custom_call.1} parent=11 // pred_fallthru
          _
      $region12: #{tpu_custom_call.1} parent=5 // pred_fallthru
        _
      %p379 = scmp.lt.s32.totalorder %s24, 2
      // Predicated region
      $region45: #{tpu_custom_call.1} parent=5 // pred_check
        %p380 = pneg %p379
      $region46: #{tpu_custom_call.1} parent=5 // pred_check_branch
        %382 = sbr.rel (%p380) target = $region48
      $region47: #{tpu_custom_call.1} parent=5 // pred_region
        // Predicated region
        $region49: #{tpu_custom_call.1} parent=47 // pred_check
          %p383 = pneg %p58
        $region50: #{tpu_custom_call.1} parent=47 // pred_check_branch
          %385 = sbr.rel (%p383) target = $region52
        $region51: #{tpu_custom_call.1} parent=47 // pred_region
          %s386 = smul.u32 2, %s32
          %p387 = scmp.lt.s32.totalorder %s31, 1
          %s388 = scalar_select %p387, %s31, 1
          %p389 = scmp.lt.s32.totalorder %s386, 1
          %s390 = scalar_select %p389, %s386, 1
          %s391 = smul.addr %s388, 2
          %s392 = sadd.s32 %s390, %s391
          %s393 = smul.addr %s392, 4
          %s394 = scalar_lea.vmem %s0, %s393
          %s395 = smul.u32 2, %s32
        $region52: #{tpu_custom_call.1} parent=47 // pred_fallthru
          _
        // Predicated region
        $region53: #{tpu_custom_call.1} parent=47 // pred_check
          %p396 = pneg %p86
        $region54: #{tpu_custom_call.1} parent=47 // pred_check_branch
          %398 = sbr.rel (%p396) target = $region56
        $region55: #{tpu_custom_call.1} parent=47 // pred_region
          %s399 = smul.u32 2, %s32
          %p400 = scmp.lt.s32.totalorder %s31, 1
          %s401 = scalar_select %p400, %s31, 1
          %p402 = scmp.lt.s32.totalorder %s399, 1
          %s403 = scalar_select %p402, %s399, 1
          %s404 = smul.addr %s401, 2
          %s405 = sadd.s32 %s403, %s404
          %s406 = smul.addr %s405, 4
          %s407 = scalar_lea.vmem %s1, %s406
          %s408 = smul.u32 2, %s32
        $region56: #{tpu_custom_call.1} parent=47 // pred_fallthru
          _
      $region48: #{tpu_custom_call.1} parent=5 // pred_fallthru
        _
      %p409 = scmp.le.s32.totalorder 1, %s24
      %p410 = scmp.lt.s32.totalorder %s24, 3
      %p411 = pnand %p409, %p410
      %p412 = pneg %p411
      // Predicated region
      $region57: #{tpu_custom_call.1} parent=5 // pred_check
        _
      $region58: #{tpu_custom_call.1} parent=5 // pred_check_branch
        %414 = sbr.rel (%p411) target = $region60
      $region59: #{tpu_custom_call.1} parent=5 // pred_region
        %s415 = ssub.s32 %s24, 1
        %s416 = smul.u32 2, %s34
        %p417 = scmp.lt.s32.totalorder %s33, 1
        %s418 = scalar_select %p417, %s33, 1
        %p419 = scmp.lt.s32.totalorder %s416, 1
        %s420 = scalar_select %p419, %s416, 1
        %s421 = smul.addr %s418, 2
        %s422 = sadd.s32 %s420, %s421
        %s423 = smul.addr %s422, 4
        %s424 = scalar_lea.vmem %s0, %s423
        %p425 = pneg %p64
        %p426 = pneg %p61
        %s427 = smul.u32 2, %s34
        %p428 = scmp.lt.s32.totalorder %s33, 1
        %s429 = scalar_select %p428, %s33, 1
        %p430 = scmp.lt.s32.totalorder %s427, 1
        %s431 = scalar_select %p430, %s427, 1
        %s432 = smul.addr %s429, 2
        %s433 = sadd.s32 %s431, %s432
        %s434 = smul.addr %s433, 4
        %s435 = scalar_lea.vmem %s1, %s434
        %p436 = pneg %p92
        %p437 = pneg %p89
        %p438 = pneg %p113
        %p439 = pneg %p110
        %p440 = pneg %p134
        %p441 = pneg %p131
        %p442 = pneg %p155
        %p443 = pneg %p152
        %p444 = pneg %p176
        %p445 = pneg %p173
        %p446 = pneg %p197
        %p447 = pneg %p194
        %p448 = pneg %p218
        %p449 = pneg %p215
        %p450 = pneg %p239
        %p451 = pneg %p236
        %p452 = pneg %p260
        %p453 = pneg %p257
        %p454 = pneg %p288
        %p455 = pneg %p285
        %s456 = sand.u32 %s275, 1
        %s457 = scalar_lea.sflag [#allocation4], %s456
        %s458 = sand.u32 %s275, 1
        %s459 = smul.addr %s458, 2
        %s460 = scalar_lea.vmem [#allocation3], %s459
        %p461 = pneg %p314
        %p462 = pneg %p311
        %p463 = scmp.lt.s32.totalorder %s33, 1
        %s464 = scalar_select %p463, %s33, 1
        %s465 = smul.addr %s464, 4
        %s466 = scalar_lea.vmem %s11, %s465
        %p467 = pneg %p340
        %p468 = pneg %p337
        %p469 = scmp.lt.s32.totalorder %s33, 1
        %s470 = scalar_select %p469, %s33, 1
        %s471 = smul.addr %s470, 4
        %s472 = scalar_lea.vmem %s12, %s471
        %s473 = smul.u32 2, %s34
        %p474 = scmp.lt.s32.totalorder %s33, 1
        %s475 = scalar_select %p474, %s33, 1
        %p476 = scmp.lt.s32.totalorder %s473, 1
        %s477 = scalar_select %p476, %s473, 1
        %s478 = smul.addr %s475, 2
        %s479 = sadd.s32 %s477, %s478
        %s480 = smul.addr %s479, 4
        %s481 = scalar_lea.vmem %s0, %s480
        %s482 = smul.u32 2, %s34
        %s483 = smul.u32 2, %s34
        %p484 = scmp.lt.s32.totalorder %s33, 1
        %s485 = scalar_select %p484, %s33, 1
        %p486 = scmp.lt.s32.totalorder %s483, 1
        %s487 = scalar_select %p486, %s483, 1
        %s488 = smul.addr %s485, 2
        %s489 = sadd.s32 %s487, %s488
        %s490 = smul.addr %s489, 4
        %s491 = scalar_lea.vmem %s1, %s490
        %s492 = smul.u32 2, %s34
        %s493 = smul.u32 2, %s34
        %p494 = scmp.lt.s32.totalorder %s33, 1
        %s495 = scalar_select %p494, %s33, 1
        %s496 = smul.addr %s495, 4
        %s497 = scalar_lea.vmem %s11, %s496
        %p498 = scmp.lt.s32.totalorder %s33, 1
        %s499 = scalar_select %p498, %s33, 1
        %s500 = smul.addr %s499, 4
        %s501 = scalar_lea.vmem %s12, %s500
        %p502 = scmp.eq.s32.totalorder %s34, 0
        // Predicated region
        $region61: #{tpu_custom_call.1} parent=59 // pred_check
          %p503 = pneg %p502
        $region62: #{tpu_custom_call.1} parent=59 // pred_check_branch
          %505 = sbr.rel (%p503) target = $region64
        $region63: #{tpu_custom_call.1} parent=59 // pred_region
          %vm506 = vcmask 3072
          %507 = vst.msk [vmem:[%s497] sm:$0xf] %vm506, 0.0
          %508 = vst.msk [vmem:[%s501] sm:$0xf] %vm506, 0.0
        $region64: #{tpu_custom_call.1} parent=59 // pred_fallthru
          _
        %v509 = vld [vmem:[%s481] sm:$0xff]
        %v510 = vld [vmem:[%s491] sm:$0xff]
        %v511 = vld [vmem:[%s2] sm:$0xff]
        %v512 = vld [vmem:[%s3] sm:$0xff]
        %514 = vset.pattern.permute.xlu0 0
        %515 = vperm.xlu0 %514, %v512
        %v516 = vpop.permute.xlu0 %515
        %v519 = vcombine.high %v509, %v509
        %vm520 = vcmask 31744
        %v522 = vsel %vm520, %v511, 0
        %vm524 = vcmask 1043456
        %v525 = vsel %vm524, %v509, 0
        %v527 = vsel %vm524, %v519, 0
        %529 = vmatprep.subr.mxu0 %v527
        %530 = vmatpush1.msra.mxu0 %v525
        %531 = vmatprep.subr.mxu0 0.0
        %532 = vmatpush1.msra.mxu0 0.0
        %533 = vmatprep.subr.mxu0 0.0
        %534 = vmatpush1.msra.mxu0 0.0
        %535 = vmatprep.subr.mxu0 0.0
        %536 = vmatpush1.msra.mxu0 0.0
        %537 = vmatprep.subr.mxu0 0.0
        %538 = vmatpush1.msra.mxu0 0.0
        %539 = vmatprep.subr.mxu0 0.0
        %540 = vmatpush1.msra.mxu0 0.0
        %541 = vmatprep.subr.mxu0 0.0
        %542 = vmatpush1.msra.mxu0 0.0
        %543 = vmatprep.subr.mxu0 0.0
        %544 = vmatpush1.msra.mxu0 0.0
        %545 = vmatprep.subr.mxu0 0.0
        %546 = vmatpush1.msra.mxu0 0.0
        %547 = vmatprep.subr.mxu0 0.0
        %548 = vmatpush1.msra.mxu0 0.0
        %549 = vmatprep.subr.mxu0 0.0
        %550 = vmatpush1.msra.mxu0 0.0
        %551 = vmatprep.subr.mxu0 0.0
        %552 = vmatpush1.msra.mxu0 0.0
        %553 = vmatprep.subr.mxu0 0.0
        %554 = vmatpush1.msra.mxu0 0.0
        %555 = vmatprep.subr.mxu0 0.0
        %556 = vmatpush1.msra.mxu0 0.0
        %557 = vmatprep.subr.mxu0 0.0
        %558 = vmatpush1.msra.mxu0 0.0
        %559 = vmatprep.subr.mxu0 0.0
        %560 = vmatpush1.msra.mxu0 0.0
        %561 = vmatprep.subr.mxu0 0.0
        %562 = vmatpush1.msra.mxu0 0.0
        %563 = vmatprep.subr.mxu0 0.0
        %564 = vmatpush1.msra.mxu0 0.0
        %565 = vmatprep.subr.mxu0 0.0
        %566 = vmatpush1.msra.mxu0 0.0
        %567 = vmatprep.subr.mxu0 0.0
        %568 = vmatpush1.msra.mxu0 0.0
        %569 = vmatprep.subr.mxu0 0.0
        %570 = vmatpush1.msra.mxu0 0.0
        %571 = vmatprep.subr.mxu0 0.0
        %572 = vmatpush1.msra.mxu0 0.0
        %573 = vmatprep.subr.mxu0 0.0
        %574 = vmatpush1.msra.mxu0 0.0
        %575 = vmatprep.subr.mxu0 0.0
        %576 = vmatpush1.msra.mxu0 0.0
        %577 = vmatprep.subr.mxu0 0.0
        %578 = vmatpush1.msra.mxu0 0.0
        %579 = vmatprep.subr.mxu0 0.0
        %580 = vmatpush1.msra.mxu0 0.0
        %581 = vmatprep.subr.mxu0 0.0
        %582 = vmatpush1.msra.mxu0 0.0
        %583 = vmatprep.subr.mxu0 0.0
        %584 = vmatpush1.msra.mxu0 0.0
        %585 = vmatprep.subr.mxu0 0.0
        %586 = vmatpush1.msra.mxu0 0.0
        %587 = vmatprep.subr.mxu0 0.0
        %588 = vmatpush1.msra.mxu0 0.0
        %589 = vmatprep.subr.mxu0 0.0
        %590 = vmatpush1.msra.mxu0 0.0
        %591 = vmatprep.subr.mxu0 0.0
        %592 = vmatpush1.msra.mxu0 0.0
        %593 = vmatprep.mubr.f32.mxu0 0.0
        %594 = vmatmul.mubr.f32.gmra.mrb[0].mxu0 %v522
        %v595 = vpop.f32.mrb[0].mxu0
        %v596 = vadd.f32 %v516, %v595
        %v597 = vpop.f32.mrb[0].mxu0
        %v598 = vadd.f32 %v516, %v597
        %599 = vdwg.mxu0
        %v600 = vld [vmem:[%s4] sm:$0xff]
        %v601 = vld [vmem:[%s5] sm:$0xff]
        %603 = vset.pattern.permute.xlu0 0
        %604 = vperm.xlu0 %603, %v601
        %v605 = vpop.permute.xlu0 %604
        %v608 = vcombine.high %v510, %v510
        %v610 = vsel %vm520, %v600, 0
        %v612 = vsel %vm524, %v510, 0
        %v614 = vsel %vm524, %v608, 0
        %616 = vmatprep.subr.mxu0 %v614
        %617 = vmatpush1.msra.mxu0 %v612
        %618 = vmatprep.subr.mxu0 0.0
        %619 = vmatpush1.msra.mxu0 0.0
        %620 = vmatprep.subr.mxu0 0.0
        %621 = vmatpush1.msra.mxu0 0.0
        %622 = vmatprep.subr.mxu0 0.0
        %623 = vmatpush1.msra.mxu0 0.0
        %624 = vmatprep.subr.mxu0 0.0
        %625 = vmatpush1.msra.mxu0 0.0
        %626 = vmatprep.subr.mxu0 0.0
        %627 = vmatpush1.msra.mxu0 0.0
        %628 = vmatprep.subr.mxu0 0.0
        %629 = vmatpush1.msra.mxu0 0.0
        %630 = vmatprep.subr.mxu0 0.0
        %631 = vmatpush1.msra.mxu0 0.0
        %632 = vmatprep.subr.mxu0 0.0
        %633 = vmatpush1.msra.mxu0 0.0
        %634 = vmatprep.subr.mxu0 0.0
        %635 = vmatpush1.msra.mxu0 0.0
        %636 = vmatprep.subr.mxu0 0.0
        %637 = vmatpush1.msra.mxu0 0.0
        %638 = vmatprep.subr.mxu0 0.0
        %639 = vmatpush1.msra.mxu0 0.0
        %640 = vmatprep.subr.mxu0 0.0
        %641 = vmatpush1.msra.mxu0 0.0
        %642 = vmatprep.subr.mxu0 0.0
        %643 = vmatpush1.msra.mxu0 0.0
        %644 = vmatprep.subr.mxu0 0.0
        %645 = vmatpush1.msra.mxu0 0.0
        %646 = vmatprep.subr.mxu0 0.0
        %647 = vmatpush1.msra.mxu0 0.0
        %648 = vmatprep.subr.mxu0 0.0
        %649 = vmatpush1.msra.mxu0 0.0
        %650 = vmatprep.subr.mxu0 0.0
        %651 = vmatpush1.msra.mxu0 0.0
        %652 = vmatprep.subr.mxu0 0.0
        %653 = vmatpush1.msra.mxu0 0.0
        %654 = vmatprep.subr.mxu0 0.0
        %655 = vmatpush1.msra.mxu0 0.0
        %656 = vmatprep.subr.mxu0 0.0
        %657 = vmatpush1.msra.mxu0 0.0
        %658 = vmatprep.subr.mxu0 0.0
        %659 = vmatpush1.msra.mxu0 0.0
        %660 = vmatprep.subr.mxu0 0.0
        %661 = vmatpush1.msra.mxu0 0.0
        %662 = vmatprep.subr.mxu0 0.0
        %663 = vmatpush1.msra.mxu0 0.0
        %664 = vmatprep.subr.mxu0 0.0
        %665 = vmatpush1.msra.mxu0 0.0
        %666 = vmatprep.subr.mxu0 0.0
        %667 = vmatpush1.msra.mxu0 0.0
        %668 = vmatprep.subr.mxu0 0.0
        %669 = vmatpush1.msra.mxu0 0.0
        %670 = vmatprep.subr.mxu0 0.0
        %671 = vmatpush1.msra.mxu0 0.0
        %672 = vmatprep.subr.mxu0 0.0
        %673 = vmatpush1.msra.mxu0 0.0
        %674 = vmatprep.subr.mxu0 0.0
        %675 = vmatpush1.msra.mxu0 0.0
        %676 = vmatprep.subr.mxu0 0.0
        %677 = vmatpush1.msra.mxu0 0.0
        %678 = vmatprep.subr.mxu0 0.0
        %679 = vmatpush1.msra.mxu0 0.0
        %680 = vmatprep.mubr.f32.mxu0 0.0
        %681 = vmatmul.mubr.f32.gmra.mrb[0].mxu0 %v610
        %v682 = vpop.f32.mrb[0].mxu0
        %v683 = vadd.f32 %v605, %v682
        %v684 = vpop.f32.mrb[0].mxu0
        %v685 = vadd.f32 %v605, %v684
        %686 = vdwg.mxu0
        %v687 = vadd.f32 %v596, %v683
        %v688 = vadd.f32 %v598, %v685
        %v689 = vmax.f32 %v687, 0.0
        %v690 = vmax.f32 %v688, 0.0
        %v691 = vld [vmem:[%s6] sm:$0x1]
        %v692 = vld [vmem:[#allocation2] sm:$0x1]
        %694 = vset.pattern.permute.xlu0 0
        %695 = vperm.xlu0 %694, %v692
        %v696 = vpop.permute.xlu0 %695
        %v698 = vlaneseq
        %v699 = vshrl.u32 %v698, 7
        %v700 = vsub.s32 0, %v699
        %v701 = vrot.slane %v696, %v700
        %vm702 = vcmask 64512
        %v704 = vsel %vm702, %v691, 0
        %706 = vmatprep.subr.mxu0 %v690
        %707 = vmatpush1.msra.mxu0 %v689
        %708 = vmatprep.subr.mxu0 0.0
        %709 = vmatpush1.msra.mxu0 0.0
        %710 = vmatprep.subr.mxu0 0.0
        %711 = vmatpush1.msra.mxu0 0.0
        %712 = vmatprep.subr.mxu0 0.0
        %713 = vmatpush1.msra.mxu0 0.0
        %714 = vmatprep.subr.mxu0 0.0
        %715 = vmatpush1.msra.mxu0 0.0
        %716 = vmatprep.subr.mxu0 0.0
        %717 = vmatpush1.msra.mxu0 0.0
        %718 = vmatprep.subr.mxu0 0.0
        %719 = vmatpush1.msra.mxu0 0.0
        %720 = vmatprep.subr.mxu0 0.0
        %721 = vmatpush1.msra.mxu0 0.0
        %722 = vmatprep.subr.mxu0 0.0
        %723 = vmatpush1.msra.mxu0 0.0
        %724 = vmatprep.subr.mxu0 0.0
        %725 = vmatpush1.msra.mxu0 0.0
        %726 = vmatprep.subr.mxu0 0.0
        %727 = vmatpush1.msra.mxu0 0.0
        %728 = vmatprep.subr.mxu0 0.0
        %729 = vmatpush1.msra.mxu0 0.0
        %730 = vmatprep.subr.mxu0 0.0
        %731 = vmatpush1.msra.mxu0 0.0
        %732 = vmatprep.subr.mxu0 0.0
        %733 = vmatpush1.msra.mxu0 0.0
        %734 = vmatprep.subr.mxu0 0.0
        %735 = vmatpush1.msra.mxu0 0.0
        %736 = vmatprep.subr.mxu0 0.0
        %737 = vmatpush1.msra.mxu0 0.0
        %738 = vmatprep.subr.mxu0 0.0
        %739 = vmatpush1.msra.mxu0 0.0
        %740 = vmatprep.subr.mxu0 0.0
        %741 = vmatpush1.msra.mxu0 0.0
        %742 = vmatprep.subr.mxu0 0.0
        %743 = vmatpush1.msra.mxu0 0.0
        %744 = vmatprep.subr.mxu0 0.0
        %745 = vmatpush1.msra.mxu0 0.0
        %746 = vmatprep.subr.mxu0 0.0
        %747 = vmatpush1.msra.mxu0 0.0
        %748 = vmatprep.subr.mxu0 0.0
        %749 = vmatpush1.msra.mxu0 0.0
        %750 = vmatprep.subr.mxu0 0.0
        %751 = vmatpush1.msra.mxu0 0.0
        %752 = vmatprep.subr.mxu0 0.0
        %753 = vmatpush1.msra.mxu0 0.0
        %754 = vmatprep.subr.mxu0 0.0
        %755 = vmatpush1.msra.mxu0 0.0
        %756 = vmatprep.subr.mxu0 0.0
        %757 = vmatpush1.msra.mxu0 0.0
        %758 = vmatprep.subr.mxu0 0.0
        %759 = vmatpush1.msra.mxu0 0.0
        %760 = vmatprep.subr.mxu0 0.0
        %761 = vmatpush1.msra.mxu0 0.0
        %762 = vmatprep.subr.mxu0 0.0
        %763 = vmatpush1.msra.mxu0 0.0
        %764 = vmatprep.subr.mxu0 0.0
        %765 = vmatpush1.msra.mxu0 0.0
        %766 = vmatprep.subr.mxu0 0.0
        %767 = vmatpush1.msra.mxu0 0.0
        %768 = vmatprep.subr.mxu0 0.0
        %769 = vmatpush1.msra.mxu0 0.0
        %770 = vmatprep.mubr.f32.mxu0 0.0
        %771 = vmatmul.mubr.f32.gmra.mrb[0].mxu0 %v704
        %v772 = vpop.f32.mrb[0].mxu0
        %v773 = vadd.f32 %v701, %v772
        %v774 = vpop.f32.mrb[0].mxu0
        %v775 = vadd.f32 %v701, %v774
        %776 = vdwg.mxu0
        %v777 = vsub.f32 0.0, %v773
        %v778 = vsub.f32 0.0, %v775
        %v779 = vmul.f32 %v777, 1.442695
        %v780 = vpow.pop %v779
        %v781 = vmul.f32 %v778, 1.442695
        %v782 = vpow.pop %v781
        %v783 = vadd.f32 %v780, 1.0
        %v784 = vadd.f32 %v782, 1.0
        %v785 = vrcp.pop %v783
        %v786 = vmul.f32 1.0, %v785
        %v787 = vrcp.pop %v784
        %v788 = vmul.f32 1.0, %v787
        %v789 = vlaneseq
        %v790 = vshrl.u32 %v789, 7
        %v791 = vsub.s32 0, %v790
        %v792 = vrot.slane %v786, %v791
        %v793 = vlaneseq
        %v794 = vshrl.u32 %v793, 7
        %v795 = vsub.s32 0, %v794
        %v796 = vrot.slane %v788, %v795
        %v798 = vmul.f32 %v792, %v509
        %v799 = vmul.f32 %v796, %v519
        %v800 = vld [vmem:[%s8] sm:$0xf]
        %v801 = vld [vmem:[%s9] sm:$0xf]
        %803 = vset.pattern.permute.xlu0 0
        %804 = vperm.xlu0 %803, %v801
        %v805 = vpop.permute.xlu0 %804
        %v808 = vsel %vm520, %v800, 0
        %v811 = vsel %vm524, %v798, 0
        %v814 = vsel %vm524, %v799, 0
        %816 = vmatprep.subr.mxu0 %v814
        %817 = vmatpush1.msra.mxu0 %v811
        %818 = vmatprep.subr.mxu0 0.0
        %819 = vmatpush1.msra.mxu0 0.0
        %820 = vmatprep.subr.mxu0 0.0
        %821 = vmatpush1.msra.mxu0 0.0
        %822 = vmatprep.subr.mxu0 0.0
        %823 = vmatpush1.msra.mxu0 0.0
        %824 = vmatprep.subr.mxu0 0.0
        %825 = vmatpush1.msra.mxu0 0.0
        %826 = vmatprep.subr.mxu0 0.0
        %827 = vmatpush1.msra.mxu0 0.0
        %828 = vmatprep.subr.mxu0 0.0
        %829 = vmatpush1.msra.mxu0 0.0
        %830 = vmatprep.subr.mxu0 0.0
        %831 = vmatpush1.msra.mxu0 0.0
        %832 = vmatprep.subr.mxu0 0.0
        %833 = vmatpush1.msra.mxu0 0.0
        %834 = vmatprep.subr.mxu0 0.0
        %835 = vmatpush1.msra.mxu0 0.0
        %836 = vmatprep.subr.mxu0 0.0
        %837 = vmatpush1.msra.mxu0 0.0
        %838 = vmatprep.subr.mxu0 0.0
        %839 = vmatpush1.msra.mxu0 0.0
        %840 = vmatprep.subr.mxu0 0.0
        %841 = vmatpush1.msra.mxu0 0.0
        %842 = vmatprep.subr.mxu0 0.0
        %843 = vmatpush1.msra.mxu0 0.0
        %844 = vmatprep.subr.mxu0 0.0
        %845 = vmatpush1.msra.mxu0 0.0
        %846 = vmatprep.subr.mxu0 0.0
        %847 = vmatpush1.msra.mxu0 0.0
        %848 = vmatprep.subr.mxu0 0.0
        %849 = vmatpush1.msra.mxu0 0.0
        %850 = vmatprep.subr.mxu0 0.0
        %851 = vmatpush1.msra.mxu0 0.0
        %852 = vmatprep.subr.mxu0 0.0
        %853 = vmatpush1.msra.mxu0 0.0
        %854 = vmatprep.subr.mxu0 0.0
        %855 = vmatpush1.msra.mxu0 0.0
        %856 = vmatprep.subr.mxu0 0.0
        %857 = vmatpush1.msra.mxu0 0.0
        %858 = vmatprep.subr.mxu0 0.0
        %859 = vmatpush1.msra.mxu0 0.0
        %860 = vmatprep.subr.mxu0 0.0
        %861 = vmatpush1.msra.mxu0 0.0
        %862 = vmatprep.subr.mxu0 0.0
        %863 = vmatpush1.msra.mxu0 0.0
        %864 = vmatprep.subr.mxu0 0.0
        %865 = vmatpush1.msra.mxu0 0.0
        %866 = vmatprep.subr.mxu0 0.0
        %867 = vmatpush1.msra.mxu0 0.0
        %868 = vmatprep.subr.mxu0 0.0
        %869 = vmatpush1.msra.mxu0 0.0
        %870 = vmatprep.subr.mxu0 0.0
        %871 = vmatpush1.msra.mxu0 0.0
        %872 = vmatprep.subr.mxu0 0.0
        %873 = vmatpush1.msra.mxu0 0.0
        %874 = vmatprep.subr.mxu0 0.0
        %875 = vmatpush1.msra.mxu0 0.0
        %876 = vmatprep.subr.mxu0 0.0
        %877 = vmatpush1.msra.mxu0 0.0
        %878 = vmatprep.subr.mxu0 0.0
        %879 = vmatpush1.msra.mxu0 0.0
        %880 = vmatprep.mubr.f32.mxu0 0.0
        %881 = vmatmul.mubr.f32.gmra.mrb[0].mxu0 %v808
        %v882 = vpop.f32.mrb[0].mxu0
        %v883 = vadd.f32 %v805, %v882
        %v884 = vpop.f32.mrb[0].mxu0
        %v885 = vadd.f32 %v805, %v884
        %886 = vdwg.mxu0
        %v889 = vcombine.low %v786, %v788
        %v891 = vunpack.c.l.s4 1966171168
        %v892 = vunpack.c.0.s8 %v891
        %v893 = vlaneseq
        %v894 = vshrl.u32 %v893, 7
        %v895 = vsub.s32 %v892, %v894
        %v896 = vrot.slane %v889, %v895
        %v898 = vunpack.c.l.s4 1966171168
        %v899 = vunpack.c.0.s8 %v898
        %v900 = vlaneseq
        %v901 = vshrl.u32 %v900, 7
        %v902 = vsub.s32 %v899, %v901
        %v903 = vrot.slane %v896, %v902
        %v905 = vlaneseq
        %vm906 = vcmp.ge.s32.totalorder %v905, 0
        %vm907 = vcmp.lt.s32.totalorder %v905, 256
        %vm908 = vmand %vm906, %vm907
        %909 = vst.msk [vmem:[%s460] sm:$0x3] %vm908, %v903
        %v910 = vld [vmem:[%s497] sm:$0xf]
        %v911 = vsel %vm524, %v883, 0.0
        %v912 = vsel %vm524, %v885, 0.0
        %v913 = vadd.f32 %v911, %v912
        %914 = vadd.xlane.f32.xlu0 %v913
        %v915 = vpop.xlane.xlu0 %914
        %v916 = vadd.f32 %v910, %v915
        %vm917 = vcmask 3072
        %918 = vst.msk [vmem:[%s497] sm:$0xf] %vm917, %v916
        %v919 = vld [vmem:[%s501] sm:$0xf]
        %v920 = vmul.f32 %v883, %v883
        %v921 = vmul.f32 %v885, %v885
        %v922 = vsel %vm524, %v920, 0.0
        %v923 = vsel %vm524, %v921, 0.0
        %v924 = vadd.f32 %v922, %v923
        %925 = vadd.xlane.f32.xlu0 %v924
        %v926 = vpop.xlane.xlu0 %925
        %v927 = vadd.f32 %v919, %v926
        %928 = vst.msk [vmem:[%s501] sm:$0xf] %vm917, %v927
        %s929 = sand.u32 %s275, 1
        %s930 = scalar_lea.sflag [#allocation4], %s929
        %s931 = sand.u32 %s275, 1
        %s932 = smul.addr %s931, 2
        %s933 = scalar_lea.vmem [#allocation3], %s932
        %p934 = scmp.lt.s32.totalorder %s33, 1
        %s935 = scalar_select %p934, %s33, 1
        %s936 = smul.addr %s935, 4
        %s937 = scalar_lea.vmem %s11, %s936
        %p938 = scmp.lt.s32.totalorder %s33, 1
        %s939 = scalar_select %p938, %s33, 1
        %s940 = smul.addr %s939, 4
        %s941 = scalar_lea.vmem %s12, %s940
        // Predicated region
        $region65: #{tpu_custom_call.1} parent=59 // pred_check
          %p942 = pneg %p285
        $region66: #{tpu_custom_call.1} parent=59 // pred_check_branch
          %944 = sbr.rel (%p942) target = $region68
        $region67: #{tpu_custom_call.1} parent=59 // pred_region
          %s945 = smul.u32 2, %s34
          %s947 = ssub.s32 32, 32
          %948 = vsyncadd %s930, %s947
          %s949 = smul.addr %s33, 2
          %s950 = sadd.s32 %s945, %s949
          %s951 = smul.addr %s950, 16
          %s952 = scalar_lea.hbm %s10, %s951
          %s954 = sshll.u32 %s933, 4
          %s955 = int_to_ptr.vmem [resolvable:$true] %s954
          %957 = dma.vmem_to_hbm [thread:$0]  %s955, 32, %s952, %s930
        $region68: #{tpu_custom_call.1} parent=59 // pred_fallthru
          _
        // Predicated region
        $region69: #{tpu_custom_call.1} parent=59 // pred_check
          %p958 = pneg %p311
        $region70: #{tpu_custom_call.1} parent=59 // pred_check_branch
          %960 = sbr.rel (%p958) target = $region72
        $region71: #{tpu_custom_call.1} parent=59 // pred_region
          _
        $region72: #{tpu_custom_call.1} parent=59 // pred_fallthru
          _
        // Predicated region
        $region73: #{tpu_custom_call.1} parent=59 // pred_check
          %p961 = pneg %p337
        $region74: #{tpu_custom_call.1} parent=59 // pred_check_branch
          %963 = sbr.rel (%p961) target = $region76
        $region75: #{tpu_custom_call.1} parent=59 // pred_region
          _
        $region76: #{tpu_custom_call.1} parent=59 // pred_fallthru
          _
      $region60: #{tpu_custom_call.1} parent=5 // pred_fallthru
        _
      %p964 = scmp.le.s32.totalorder 2, %s24
      // Predicated region
      $region77: #{tpu_custom_call.1} parent=5 // pred_check
        %p965 = pneg %p964
      $region78: #{tpu_custom_call.1} parent=5 // pred_check_branch
        %967 = sbr.rel (%p965) target = $region80
      $region79: #{tpu_custom_call.1} parent=5 // pred_region
        %s968 = ssub.s32 %s24, 2
        // Predicated region
        $region81: #{tpu_custom_call.1} parent=79 // pred_check
          %p969 = pneg %p291
        $region82: #{tpu_custom_call.1} parent=79 // pred_check_branch
          %971 = sbr.rel (%p969) target = $region84
        $region83: #{tpu_custom_call.1} parent=79 // pred_region
          %s972 = sand.u32 %s276, 1
          %s973 = scalar_lea.sflag [#allocation4], %s972
          %s974 = sand.u32 %s276, 1
          %s975 = smul.addr %s974, 2
          %s976 = scalar_lea.vmem [#allocation3], %s975
          %977 = dma.done %s973, 32
        $region84: #{tpu_custom_call.1} parent=79 // pred_fallthru
          _
        // Predicated region
        $region85: #{tpu_custom_call.1} parent=79 // pred_check
          %p978 = pneg %p317
        $region86: #{tpu_custom_call.1} parent=79 // pred_check_branch
          %980 = sbr.rel (%p978) target = $region88
        $region87: #{tpu_custom_call.1} parent=79 // pred_region
          %p981 = scmp.lt.s32.totalorder %s35, 1
          %s982 = scalar_select %p981, %s35, 1
          %s983 = smul.addr %s982, 4
          %s984 = scalar_lea.vmem %s11, %s983
        $region88: #{tpu_custom_call.1} parent=79 // pred_fallthru
          _
        // Predicated region
        $region89: #{tpu_custom_call.1} parent=79 // pred_check
          %p985 = pneg %p343
        $region90: #{tpu_custom_call.1} parent=79 // pred_check_branch
          %987 = sbr.rel (%p985) target = $region92
        $region91: #{tpu_custom_call.1} parent=79 // pred_region
          %p988 = scmp.lt.s32.totalorder %s35, 1
          %s989 = scalar_select %p988, %s35, 1
          %s990 = smul.addr %s989, 4
          %s991 = scalar_lea.vmem %s12, %s990
        $region92: #{tpu_custom_call.1} parent=79 // pred_fallthru
          _
      $region80: #{tpu_custom_call.1} parent=5 // pred_fallthru
        _
    $region6: #{tpu_custom_call.1} parent=1 // loop_footer
      %s28 = sadd.s32 1, %s24
    $region7: #{tpu_custom_call.1} parent=1 // loop_footer_branch
      %23 = sbr.rel target = $region3
    $region8: #{tpu_custom_call.1} parent=1 // loop_exit
      _
    %992 = vsyncpa [#allocation4], 1
    %s993 = scalar_lea.sflag [#allocation4], 1
    %994 = vsyncpa %s993, 1

</llo_original>
